<compile_context>
chip_gen: v7x
topology: tpu7x:2x2x1
jax: 0.10.0
libtpu: 0.0.40
codegen_flags: <defaults>
</compile_context>

<pallas_src>
import jax
import jax.numpy as jnp
from jax import lax
from jax.experimental import pallas as pl
from jax.experimental.pallas import tpu as pltpu

EPS = 1e-5  # BatchNorm3d default eps


# --------------------------------------------------------------------------------------
# Kernels
# --------------------------------------------------------------------------------------
def conv_stats_kernel(patch_ref, w_ref, stats_ref):
    """Pass 1: conv tile + per-channel partial sums for BatchNorm.

    patch_ref: (1, Kc, TS)     bf16   (Kc = K^3*Cin taps, TS = spatial tile, lane-dense)
    w_ref:     (Cout, Kc)      bf16
    stats_ref: (1, 1, Cout, 2) f32    ([:, 0] = sum, [:, 1] = sum of squares)
    """
    conv = jnp.dot(w_ref[...], patch_ref[0],
                   preferred_element_type=jnp.float32)            # (Cout, TS) on the MXU
    s = jnp.sum(conv, axis=1, keepdims=True)                      # (Cout, 1)  cross-lane (XLU)
    ss = jnp.sum(conv * conv, axis=1, keepdims=True)              # (Cout, 1)
    stats_ref[0, 0] = jnp.concatenate([s, ss], axis=1)            # one full-block store


def conv_bn_silu_kernel(patch_ref, w_ref, scale_ref, shift_ref, out_ref):
    """Pass 2: conv tile, fused BatchNorm (one FMA) and SiLU.

    scale_ref / shift_ref: (Cout, 1) f32 (folded gamma*rsqrt(var+eps), beta - mean*scale)
    out_ref:               (1, Cout, TS)  -- lane-dense spatial last dim, NC(DHW) layout
    """
    conv = jnp.dot(w_ref[...], patch_ref[0],
                   preferred_element_type=jnp.float32)            # (Cout, TS)
    y = conv * scale_ref[...] + shift_ref[...]                    # per-channel FMA (lane broadcast)
    y = y * jax.nn.sigmoid(y)                                     # SiLU; sigmoid on the EUP slot
    out_ref[0] = y.astype(out_ref.dtype)


# --------------------------------------------------------------------------------------
# Wrapper
# --------------------------------------------------------------------------------------
def _pick_spatial_tile(S):
    for ts in (2048, 1024, 512, 256, 128):
        if S % ts == 0:
            return ts
    return S  # small / odd spatial volumes: single full-extent tile


def _im2col(x_ncdhw, K):
    """(N, Cin, D, H, W) -> (N, K^3*Cin, D*H*W), taps ordered (kd, kh, kw, cin)."""
    N, Cin, D, H, W = x_ncdhw.shape
    p = K // 2
    xpad = jnp.pad(x_ncdhw, ((0, 0), (0, 0), (p, p), (p, p), (p, p)))
    taps = [
        lax.slice(xpad, (0, 0, kd, kh, kw), (N, Cin, kd + D, kh + H, kw + W))
        for kd in range(K) for kh in range(K) for kw in range(K)
    ]
    pat = jnp.stack(taps, axis=1)                                  # (N, K^3, Cin, D, H, W)
    return pat.reshape(N, K * K * K * Cin, D * H * W)


def block_forward(x_ncdhw, w_oikkk, b, gamma, beta):
    """x: (N, Cin, D, H, W) -> (N, Cout, D, H, W); matches Block.forward in training mode."""
    del b  # conv bias cancels exactly in training-mode BatchNorm (mean subtraction): skip the add.
    N, Cin, D, H, W = x_ncdhw.shape
    Cout, _, K, _, _ = w_oikkk.shape
    Kc = K * K * K * Cin
    S = D * H * W
    TS = _pick_spatial_tile(S)
    n_tiles = S // TS

    # Lane-dense, MXU-friendly operands: bf16 inputs, f32 accumulation inside the kernels.
    patches = _im2col(x_ncdhw, K).astype(jnp.bfloat16)             # (N, Kc, S)
    w_mat = jnp.transpose(w_oikkk, (0, 2, 3, 4, 1)).reshape(Cout, Kc).astype(jnp.bfloat16)

    patch_spec = pl.BlockSpec((1, Kc, TS), lambda n, t: (n, 0, t))
    w_spec = pl.BlockSpec((Cout, Kc), lambda n, t: (0, 0))
    parallel = pltpu.CompilerParams(dimension_semantics=("parallel", "parallel"))

    # ---- Pass 1: per-tile partial sum / sum-of-squares of the conv output -------------
    stats = pl.pallas_call(
        conv_stats_kernel,
        grid=(N, n_tiles),
        in_specs=[patch_spec, w_spec],
        out_specs=pl.BlockSpec((1, 1, Cout, 2), lambda n, t: (n, t, 0, 0)),
        out_shape=jax.ShapeDtypeStruct((N, n_tiles, Cout, 2), jnp.float32),
        compiler_params=parallel,
    )(patches, w_mat)

    # ---- Fold BN into one (scale, shift) pair per channel (tiny: Cout scalars) --------
    totals = stats.sum(axis=(0, 1))                                # (Cout, 2)
    count = jnp.float32(N * S)
    mean = totals[:, 0] / count
    var = jnp.maximum(totals[:, 1] / count - mean * mean, 0.0)     # biased variance (BN training)
    scale = gamma.astype(jnp.float32) * lax.rsqrt(var + EPS)
    shift = beta.astype(jnp.float32) - mean * scale

    # ---- Pass 2: recompute conv tile, apply BN as one FMA, SiLU, store NC(DHW) --------
    out = pl.pallas_call(
        conv_bn_silu_kernel,
        grid=(N, n_tiles),
        in_specs=[patch_spec, w_spec,
                  pl.BlockSpec((Cout, 1), lambda n, t: (0, 0)),
                  pl.BlockSpec((Cout, 1), lambda n, t: (0, 0))],
        out_specs=pl.BlockSpec((1, Cout, TS), lambda n, t: (n, 0, t)),
        out_shape=jax.ShapeDtypeStruct((N, Cout, S), x_ncdhw.dtype),
        compiler_params=parallel,
    )(patches, w_mat, scale.reshape(Cout, 1), shift.reshape(Cout, 1))

    return out.reshape(N, Cout, D, H, W)

# TODO(synk): BatchNorm3d running_mean/running_var momentum updates (training-time module state)
#             are not modeled; only the forward output is reproduced.
# TODO(synk): for very large inputs, build the patch rows in-kernel from a halo'd input tile via
#             manual DMA instead of wrapper-side im2col, to avoid the K^3 HBM expansion of the input.


# --------------------------------------------------------------------------------------
# Pure-JAX reference (f32, HIGHEST-precision conv) for validation
# --------------------------------------------------------------------------------------
def block_reference(x_ncdhw, w_oikkk, b, gamma, beta):
    conv = lax.conv_general_dilated(
        x_ncdhw, w_oikkk, window_strides=(1, 1, 1), padding="SAME",
        dimension_numbers=("NCDHW", "OIDHW", "NCDHW"),
        precision=lax.Precision.HIGHEST,
    ) + b.reshape(1, -1, 1, 1, 1)
    mean = jnp.mean(conv, axis=(0, 2, 3, 4), keepdims=True)
    var = jnp.mean(jnp.square(conv - mean), axis=(0, 2, 3, 4), keepdims=True)
    xhat = (conv - mean) * lax.rsqrt(var + EPS)
    y = gamma.reshape(1, -1, 1, 1, 1) * xhat + beta.reshape(1, -1, 1, 1, 1)
    return y * jax.nn.sigmoid(y)


if __name__ == "__main__":
    key = jax.random.PRNGKey(0)
    k_x, k_w, k_b = jax.random.split(key, 3)

    # Block(in_ch=4, out_ch=64, kernel_size=3) at a small shape.
    N, Cin, D, H, W = 2, 4, 8, 8, 8
    Cout, K = 64, 3

    x = jax.random.normal(k_x, (N, Cin, D, H, W), jnp.float32)

    # Deterministic parameter init (Conv3d-style uniform bounds); BN affine = (1, 0) as at init.
    fan_in = Cin * K * K * K
    bound = 1.0 / (fan_in ** 0.5)
    w = jax.random.uniform(k_w, (Cout, Cin, K, K, K), jnp.float32, -bound, bound)
    b = jax.random.uniform(k_b, (Cout,), jnp.float32, -bound, bound)
    gamma = jnp.ones((Cout,), jnp.float32)
    beta = jnp.zeros((Cout,), jnp.float32)

    out = jax.block_until_ready(block_forward(x, w, b, gamma, beta))
    assert out.shape == (N, Cout, D, H, W), out.shape

    ref = jax.block_until_ready(block_reference(x, w, b, gamma, beta))
    # bf16 MXU operands (f32 accumulation) vs. the f32/HIGHEST reference: typical max |err| on
    # BN-normalized (unit-scale) activations is ~1e-2; 5e-2 leaves margin for tail elements.
    max_err = float(jnp.max(jnp.abs(out - ref)))
    assert max_err < 5e-2, max_err

    print("KERNEL_OK")
</pallas_src>

<mosaic_0001>
module attributes {stable_mosaic.version = 11 : i64} {
  func.func @conv_stats_kernel(%arg0: i32, %arg1: i32, %arg2: memref<1x108x512xbf16, #tpu.memory_space<vmem>>, %arg3: memref<64x108xbf16, #tpu.memory_space<vmem>>, %arg4: memref<1x1x64x2xf32, #tpu.memory_space<vmem>>) attributes {dimension_semantics = [#tpu.dimension_semantics<parallel>, #tpu.dimension_semantics<parallel>], iteration_bounds = array<i64: 2, 1>, scalar_prefetch = 0 : i64, scratch_operands = 0 : i64, tpu.core_type = #tpu.core_type<tc>, window_params = [{transform_indices = @transform_0, window_bounds = array<i64: 1, 108, 512>}, {pipeline_mode = #tpu.pipeline_mode<synchronous>, transform_indices = @transform_1, window_bounds = array<i64: 64, 108>}, {transform_indices = @transform_2, window_bounds = array<i64: 1, 1, 64, 2>}]} {
    %c0 = arith.constant 0 : index
    %c0_0 = arith.constant 0 : index
    %0 = vector.load %arg3[%c0, %c0_0] : memref<64x108xbf16, #tpu.memory_space<vmem>>, vector<64x108xbf16>
    %c0_1 = arith.constant 0 : index
    %c0_2 = arith.constant 0 : index
    %c0_3 = arith.constant 0 : index
    %1 = vector.load %arg2[%c0_1, %c0_2, %c0_3] : memref<1x108x512xbf16, #tpu.memory_space<vmem>>, vector<1x108x512xbf16>
    %2 = vector.shape_cast %1 : vector<1x108x512xbf16> to vector<108x512xbf16>
    %cst = arith.constant dense<0.000000e+00> : vector<64x512xf32>
    %3 = tpu.matmul %0, %2, %cst {dimension_numbers = #tpu.dot_dimension_numbers<[1], [0], [0], [1], [0, 0, 1, 1], [], []>} : vector<64x108xbf16>, vector<108x512xbf16>, vector<64x512xf32> -> vector<64x512xf32>
    %cst_4 = arith.constant dense<0.000000e+00> : vector<64xf32>
    %4 = vector.multi_reduction <add>, %3, %cst_4 [1] : vector<64x512xf32> to vector<64xf32>
    %5 = vector.shape_cast %4 : vector<64xf32> to vector<64x1xf32>
    %6 = arith.mulf %3, %3 : vector<64x512xf32>
    %cst_5 = arith.constant dense<0.000000e+00> : vector<64xf32>
    %7 = vector.multi_reduction <add>, %6, %cst_5 [1] : vector<64x512xf32> to vector<64xf32>
    %8 = vector.shape_cast %7 : vector<64xf32> to vector<64x1xf32>
    %9 = tpu.concatenate %5, %8 in 1 : vector<64x1xf32>, vector<64x1xf32> -> vector<64x2xf32>
    %c0_6 = arith.constant 0 : index
    %c0_7 = arith.constant 0 : index
    %c0_8 = arith.constant 0 : index
    %c0_9 = arith.constant 0 : index
    %10 = vector.load %arg4[%c0_6, %c0_7, %c0_8, %c0_9] : memref<1x1x64x2xf32, #tpu.memory_space<vmem>>, vector<1x1x64x2xf32>
    %11 = vector.shape_cast %10 : vector<1x1x64x2xf32> to vector<64x2xf32>
    %12 = vector.shape_cast %9 : vector<64x2xf32> to vector<1x1x64x2xf32>
    tpu.vector_store %arg4[%c0_6, %c0_7, %c0_8, %c0_9], %12 {strides = array<i32>} : memref<1x1x64x2xf32, #tpu.memory_space<vmem>>, vector<1x1x64x2xf32>,
    return
  }
  func.func @transform_0(%arg0: i32, %arg1: i32) -> (i32, i32, i32) {
    %c0_i32 = arith.constant 0 : i32
    %c0_i32_0 = arith.constant 0 : i32
    return %arg0, %c0_i32, %arg1 : i32, i32, i32
  }
  func.func @transform_1(%arg0: i32, %arg1: i32) -> (i32, i32) {
    %c0_i32 = arith.constant 0 : i32
    %c0_i32_0 = arith.constant 0 : i32
    %c0_i32_1 = arith.constant 0 : i32
    return %c0_i32, %c0_i32_0 : i32, i32
  }
  func.func @transform_2(%arg0: i32, %arg1: i32) -> (i32, i32, i32, i32) {
    %c0_i32 = arith.constant 0 : i32
    %c0_i32_0 = arith.constant 0 : i32
    %c0_i32_1 = arith.constant 0 : i32
    return %arg0, %arg1, %c0_i32, %c0_i32_0 : i32, i32, i32, i32
  }
}

</mosaic_0001>

<llo_original>
// kernel: tpu_custom_call.1
$region0: #{tpu_custom_call.1}
  #allocation0 [shape = 'u32[]', space=smem, size = 0x4, offset = 0x4, fixed_abs, tag = 'smem constant byte address 0x4 - core index']
  #allocation1 [shape = 'u32[144,128]{1,0:T(1,128)}', space=vmem, size = 0x12000, scoped, tag = 'internal scratch']
  %s0 = inlined_call_operand.vmem [shape: bf16[2,108,512], index: 0, kind: input, shape index: {}]
  %s1 = inlined_call_operand.vmem [shape: bf16[64,108], index: 1, kind: input, shape index: {}]
  %s2 = inlined_call_operand.vmem [shape: f32[2,1,64,2], index: 2, kind: output, shape index: {}]
  %s3 = sld [smem:[#allocation0]]
  $region41: #{tpu_custom_call.1} parent=0
    _
  %s5 = ssub.s32 1, %s3
  %s6 = scalar_select 0, %s5, %s3
  loop: start=0, step=1, limit=4
  $region2: #{tpu_custom_call.1} parent=0 // loop_pre_header
    _
  $region3: #{tpu_custom_call.1} parent=0 // loop_header
    %s8 = sphi 0, %s12
    %p9 = scmp.ge.s32.totalorder %s8, 4
    %s15 = sphi 0, %s27
    %s16 = sphi 0, %s23
    %s17 = sphi 0, %s15
    %s18 = sphi 0, %s16
    %s19 = sphi 0, %s17
    %s20 = sphi 0, %s18
    %s32 = sphi 0, %s34
    %s35 = sphi 0, %s32
    %s36 = sphi 0, %s35
    %s52 = sphi 0, %s36
    %s56 = sphi 0, %s56
    %s58 = sphi 0, %s56
    %s59 = sphi 0, %s58
    %s73 = sphi 0, %s59
    %s81 = sphi 0, %s83
    %s84 = sphi 0, %s81
    %s85 = sphi 0, %s84
    %s101 = sphi 0, %s85
  $region4: #{tpu_custom_call.1} parent=0 // loop_header_branch
    %11 = sbr.rel (%p9) target = $region8
  $region5: #{tpu_custom_call.1} parent=0 // loop_body
    %s13 = ssub.s32 %s8, 1
    %s14 = ssub.s32 %s8, 2
    %s21 = sadd.s32 1, %s16
    %p22 = scmp.ge.s32.totalorder %s21, 1
    %s23 = scalar_select %p22, 0, %s21
    %s24 = sadd.s32 1, %s15
    %s25 = scalar_select %p22, %s24, %s15
    %p26 = scmp.ge.s32.totalorder %s25, 2
    %s27 = scalar_select %p26, 0, %s25
    %s28 = ssub.s32 %s15, %s27
    %s29 = ssub.s32 %s16, %s23
    %s30 = sor.u32 %s28, %s29
    %p31 = scmp.eq.s32.totalorder %s30, 0
    %s33 = sadd.s32 %s32, 1
    %s34 = scalar_select %p31, %s32, %s33
    %p37 = pneg %p31
    %p38 = scmp.eq.s32.totalorder %s8, 1
    %p39 = por %p37, %p38
    %p40 = scmp.ne.s32.totalorder %s32, %s35
    %p41 = scmp.eq.s32.totalorder %s8, 0
    %p42 = por %p40, %p41
    %p43 = scmp.ne.s32.totalorder %s32, %s35
    %p44 = scmp.eq.s32.totalorder %s13, 1
    %p45 = por %p43, %p44
    %p46 = scmp.ne.s32.totalorder %s35, %s36
    %p47 = scmp.eq.s32.totalorder %s13, 0
    %p48 = por %p46, %p47
    %p49 = scmp.ne.s32.totalorder %s35, %s36
    %p50 = scmp.eq.s32.totalorder %s14, 1
    %p51 = por %p49, %p50
    %p53 = scmp.ne.s32.totalorder %s36, %s52
    %p54 = scmp.eq.s32.totalorder %s14, 0
    %p55 = por %p53, %p54
    %s57 = sadd.s32 %s56, 1
    %p60 = scmp.eq.s32.totalorder %s8, 1
    %p61 = scmp.ne.s32.totalorder %s56, %s58
    %p62 = scmp.eq.s32.totalorder %s8, 0
    %p63 = por %p61, %p62
    %p64 = scmp.ne.s32.totalorder %s56, %s58
    %p65 = scmp.eq.s32.totalorder %s13, 1
    %p66 = por %p64, %p65
    %p67 = scmp.ne.s32.totalorder %s58, %s59
    %p68 = scmp.eq.s32.totalorder %s13, 0
    %p69 = por %p67, %p68
    %p70 = scmp.ne.s32.totalorder %s58, %s59
    %p71 = scmp.eq.s32.totalorder %s14, 1
    %p72 = por %p70, %p71
    %p74 = scmp.ne.s32.totalorder %s59, %s73
    %p75 = scmp.eq.s32.totalorder %s14, 0
    %p76 = por %p74, %p75
    %s77 = ssub.s32 %s15, %s27
    %s78 = ssub.s32 %s16, %s23
    %s79 = sor.u32 %s77, %s78
    %p80 = scmp.eq.s32.totalorder %s79, 0
    %s82 = sadd.s32 %s81, 1
    %s83 = scalar_select %p80, %s81, %s82
    %p86 = pneg %p80
    %p87 = scmp.eq.s32.totalorder %s8, 1
    %p88 = por %p86, %p87
    %p89 = scmp.ne.s32.totalorder %s81, %s84
    %p90 = scmp.eq.s32.totalorder %s8, 0
    %p91 = por %p89, %p90
    %p92 = scmp.ne.s32.totalorder %s81, %s84
    %p93 = scmp.eq.s32.totalorder %s13, 1
    %p94 = por %p92, %p93
    %p95 = scmp.ne.s32.totalorder %s84, %s85
    %p96 = scmp.eq.s32.totalorder %s13, 0
    %p97 = por %p95, %p96
    %p98 = scmp.ne.s32.totalorder %s84, %s85
    %p99 = scmp.eq.s32.totalorder %s14, 1
    %p100 = por %p98, %p99
    %p102 = scmp.ne.s32.totalorder %s85, %s101
    %p103 = scmp.eq.s32.totalorder %s14, 0
    %p104 = por %p102, %p103
    %p105 = scmp.le.s32.totalorder 1, %s8
    %p106 = scmp.lt.s32.totalorder %s8, 3
    %p107 = pnand %p105, %p106
    %p108 = pneg %p107
    // Predicated region
    $region9: #{tpu_custom_call.1} parent=5 // pred_check
      _
    $region10: #{tpu_custom_call.1} parent=5 // pred_check_branch
      %110 = sbr.rel (%p107) target = $region12
    $region11: #{tpu_custom_call.1} parent=5 // pred_region
      %s111 = ssub.s32 %s8, 1
      // Predicated region
      $region13: #{tpu_custom_call.1} parent=11 // pred_check
        %p112 = pneg %p69
      $region14: #{tpu_custom_call.1} parent=11 // pred_check_branch
        %114 = sbr.rel (%p112) target = $region16
      $region15: #{tpu_custom_call.1} parent=11 // pred_region
        _
      $region16: #{tpu_custom_call.1} parent=11 // pred_fallthru
        _
    $region12: #{tpu_custom_call.1} parent=5 // pred_fallthru
      _
    %p115 = scmp.lt.s32.totalorder %s8, 2
    // Predicated region
    $region17: #{tpu_custom_call.1} parent=5 // pred_check
      %p116 = pneg %p115
    $region18: #{tpu_custom_call.1} parent=5 // pred_check_branch
      %118 = sbr.rel (%p116) target = $region20
    $region19: #{tpu_custom_call.1} parent=5 // pred_region
      // Predicated region
      $region21: #{tpu_custom_call.1} parent=19 // pred_check
        %p119 = pneg %p42
      $region22: #{tpu_custom_call.1} parent=19 // pred_check_branch
        %121 = sbr.rel (%p119) target = $region24
      $region23: #{tpu_custom_call.1} parent=19 // pred_region
        %s122 = smul.u32 4, %s16
        %p123 = scmp.lt.s32.totalorder %s15, 1
        %s124 = scalar_select %p123, %s15, 1
        %p125 = scmp.lt.s32.totalorder %s122, 3
        %s126 = scalar_select %p125, %s122, 3
        %s127 = smul.addr %s124, 56
        %s128 = sadd.s32 %s126, %s127
        %s129 = smul.addr %s128, 4
        %s130 = scalar_lea.vmem %s0, %s129
        %s131 = smul.u32 4, %s16
      $region24: #{tpu_custom_call.1} parent=19 // pred_fallthru
        _
    $region20: #{tpu_custom_call.1} parent=5 // pred_fallthru
      _
    %p132 = scmp.le.s32.totalorder 1, %s8
    %p133 = scmp.lt.s32.totalorder %s8, 3
    %p134 = pnand %p132, %p133
    %p135 = pneg %p134
    // Predicated region
    $region25: #{tpu_custom_call.1} parent=5 // pred_check
      _
    $region26: #{tpu_custom_call.1} parent=5 // pred_check_branch
      %137 = sbr.rel (%p134) target = $region28
    $region27: #{tpu_custom_call.1} parent=5 // pred_region
      %s138 = ssub.s32 %s8, 1
      %s139 = smul.u32 4, %s18
      %p140 = scmp.lt.s32.totalorder %s17, 1
      %s141 = scalar_select %p140, %s17, 1
      %p142 = scmp.lt.s32.totalorder %s139, 3
      %s143 = scalar_select %p142, %s139, 3
      %s144 = smul.addr %s141, 56
      %s145 = sadd.s32 %s143, %s144
      %s146 = smul.addr %s145, 4
      %s147 = scalar_lea.vmem %s0, %s146
      %p148 = pneg %p48
      %p149 = pneg %p45
      %p150 = pneg %p69
      %p151 = pneg %p66
      %p152 = pneg %p97
      %p153 = pneg %p94
      %p154 = scmp.lt.s32.totalorder %s17, 1
      %s155 = scalar_select %p154, %s17, 1
      %p156 = scmp.lt.s32.totalorder %s18, 0
      %s157 = scalar_select %p156, %s18, 0
      %s158 = smul.addr %s157, 8
      %s159 = smul.addr %s155, 8
      %s160 = sadd.s32 %s158, %s159
      %s161 = smul.addr %s160, 8
      %s162 = scalar_lea.vmem %s2, %s161
      %s163 = smul.u32 4, %s18
      %p164 = scmp.lt.s32.totalorder %s17, 1
      %s165 = scalar_select %p164, %s17, 1
      %p166 = scmp.lt.s32.totalorder %s163, 3
      %s167 = scalar_select %p166, %s163, 3
      %s168 = smul.addr %s165, 56
      %s169 = sadd.s32 %s167, %s168
      %s170 = smul.addr %s169, 4
      %s171 = scalar_lea.vmem %s0, %s170
      %s172 = smul.u32 4, %s18
      %p173 = scmp.lt.s32.totalorder %s17, 1
      %s174 = scalar_select %p173, %s17, 1
      %p175 = scmp.lt.s32.totalorder %s18, 0
      %s176 = scalar_select %p175, %s18, 0
      %s177 = smul.addr %s176, 8
      %s178 = smul.addr %s174, 8
      %s179 = sadd.s32 %s177, %s178
      %s180 = smul.addr %s179, 8
      %s181 = scalar_lea.vmem %s2, %s180
      %v183 = vld [vmem:[%s1] sm:$0xf]
      %v184 = vld [vmem:[%s1 + $0x4] sm:$0xf]
      %v185 = vld [vmem:[%s1 + $0x8] sm:$0xf]
      %v186 = vld [vmem:[%s1 + $0xc] sm:$0xf]
      %v187 = vld [vmem:[%s1 + $0x10] sm:$0xf]
      %v188 = vld [vmem:[%s1 + $0x14] sm:$0xf]
      %v189 = vld [vmem:[%s1 + $0x18] sm:$0xf]
      %v190 = vld [vmem:[%s1 + $0x1c] sm:$0xf]
      %v191 = vld [vmem:[%s171] sm:$0xff]
      %v192 = vld [vmem:[%s171 + $0x8] sm:$0xff]
      %v193 = vld [vmem:[%s171 + $0x10] sm:$0xff]
      %v194 = vld [vmem:[%s171 + $0x18] sm:$0xff]
      %v195 = vld [vmem:[%s171 + $0x20] sm:$0xff]
      %v196 = vld [vmem:[%s171 + $0x28] sm:$0xff]
      %v197 = vld [vmem:[%s171 + $0x30] sm:$0xff]
      %v198 = vld [vmem:[%s171 + $0x38] sm:$0xff]
      %v199 = vld [vmem:[%s171 + $0x40] sm:$0xff]
      %v200 = vld [vmem:[%s171 + $0x48] sm:$0xff]
      %v201 = vld [vmem:[%s171 + $0x50] sm:$0xff]
      %v202 = vld [vmem:[%s171 + $0x58] sm:$0xff]
      %v203 = vld [vmem:[%s171 + $0x60] sm:$0xff]
      %v204 = vld [vmem:[%s171 + $0x68] sm:$0xff]
      %v205 = vld [vmem:[%s171 + $0x70] sm:$0xff]
      %v206 = vld [vmem:[%s171 + $0x78] sm:$0xff]
      %v207 = vld [vmem:[%s171 + $0x80] sm:$0xff]
      %v208 = vld [vmem:[%s171 + $0x88] sm:$0xff]
      %v209 = vld [vmem:[%s171 + $0x90] sm:$0xff]
      %v210 = vld [vmem:[%s171 + $0x98] sm:$0xff]
      %v211 = vld [vmem:[%s171 + $0xa0] sm:$0xff]
      %v212 = vld [vmem:[%s171 + $0xa8] sm:$0xff]
      %v213 = vld [vmem:[%s171 + $0xb0] sm:$0xff]
      %v214 = vld [vmem:[%s171 + $0xb8] sm:$0xff]
      %v215 = vld [vmem:[%s171 + $0xc0] sm:$0xff]
      %v216 = vld [vmem:[%s171 + $0xc8] sm:$0xff]
      %v217 = vld [vmem:[%s171 + $0xd0] sm:$0x33]
      %v218 = vld [vmem:[%s171 + $0xd8] sm:$0x33]
      %v227 = vunpack.c.l.b16 %v183
      %v228 = vunpack.c.l.b16 %v184
      %v229 = vunpack.c.l.b16 %v185
      %v230 = vunpack.c.l.b16 %v186
      %v231 = vunpack.c.l.b16 %v187
      %v232 = vunpack.c.l.b16 %v188
      %v233 = vunpack.c.l.b16 %v189
      %v234 = vunpack.c.l.b16 %v190
      %v235 = vpack.c.b16 %v228, %v227
      %v236 = vpack.c.b16 %v230, %v229
      %v237 = vpack.c.b16 %v232, %v231
      %v238 = vpack.c.b16 %v234, %v233
      %v267 = vunpack.c.l.b16 %v191
      %v268 = vunpack.c.h.b16 %v191
      %v269 = vunpack.c.l.b16 %v192
      %v270 = vunpack.c.h.b16 %v192
      %v271 = vunpack.c.l.b16 %v193
      %v272 = vunpack.c.h.b16 %v193
      %v273 = vunpack.c.l.b16 %v194
      %v274 = vunpack.c.h.b16 %v194
      %v275 = vunpack.c.l.b16 %v195
      %v276 = vunpack.c.h.b16 %v195
      %v277 = vunpack.c.l.b16 %v196
      %v278 = vunpack.c.h.b16 %v196
      %v279 = vunpack.c.l.b16 %v197
      %v280 = vunpack.c.h.b16 %v197
      %v281 = vunpack.c.l.b16 %v198
      %v282 = vunpack.c.h.b16 %v198
      %v283 = vunpack.c.l.b16 %v199
      %v284 = vunpack.c.h.b16 %v199
      %v285 = vunpack.c.l.b16 %v200
      %v286 = vunpack.c.h.b16 %v200
      %v287 = vunpack.c.l.b16 %v201
      %v288 = vunpack.c.h.b16 %v201
      %v289 = vunpack.c.l.b16 %v202
      %v290 = vunpack.c.h.b16 %v202
      %v291 = vunpack.c.l.b16 %v203
      %v292 = vunpack.c.h.b16 %v203
      %v293 = vunpack.c.l.b16 %v204
      %v294 = vunpack.c.h.b16 %v204
      %v295 = vunpack.c.l.b16 %v205
      %v296 = vunpack.c.h.b16 %v205
      %v297 = vunpack.c.l.b16 %v206
      %v298 = vunpack.c.h.b16 %v206
      %v299 = vunpack.c.l.b16 %v207
      %v300 = vunpack.c.h.b16 %v207
      %v301 = vunpack.c.l.b16 %v208
      %v302 = vunpack.c.h.b16 %v208
      %v303 = vunpack.c.l.b16 %v209
      %v304 = vunpack.c.h.b16 %v209
      %v305 = vunpack.c.l.b16 %v210
      %v306 = vunpack.c.h.b16 %v210
      %v307 = vunpack.c.l.b16 %v211
      %v308 = vunpack.c.h.b16 %v211
      %v309 = vunpack.c.l.b16 %v212
      %v310 = vunpack.c.h.b16 %v212
      %v311 = vunpack.c.l.b16 %v213
      %v312 = vunpack.c.h.b16 %v213
      %v313 = vunpack.c.l.b16 %v214
      %v314 = vunpack.c.h.b16 %v214
      %v315 = vunpack.c.l.b16 %v215
      %v316 = vunpack.c.h.b16 %v215
      %v317 = vunpack.c.l.b16 %v216
      %v318 = vunpack.c.h.b16 %v216
      %v319 = vunpack.c.l.b16 %v217
      %v320 = vunpack.c.h.b16 %v217
      %v321 = vunpack.c.l.b16 %v218
      %v322 = vunpack.c.h.b16 %v218
      %v323 = vpack.c.b16 %v271, %v267
      %v324 = vpack.c.b16 %v272, %v268
      %v325 = vpack.c.b16 %v273, %v269
      %v326 = vpack.c.b16 %v274, %v270
      %v327 = vpack.c.b16 %v279, %v275
      %v328 = vpack.c.b16 %v280, %v276
      %v329 = vpack.c.b16 %v281, %v277
      %v330 = vpack.c.b16 %v282, %v278
      %v331 = vpack.c.b16 %v287, %v283
      %v332 = vpack.c.b16 %v288, %v284
      %v333 = vpack.c.b16 %v289, %v285
      %v334 = vpack.c.b16 %v290, %v286
      %v335 = vpack.c.b16 %v295, %v291
      %v336 = vpack.c.b16 %v296, %v292
      %v337 = vpack.c.b16 %v297, %v293
      %v338 = vpack.c.b16 %v298, %v294
      %v339 = vpack.c.b16 %v303, %v299
      %v340 = vpack.c.b16 %v304, %v300
      %v341 = vpack.c.b16 %v305, %v301
      %v342 = vpack.c.b16 %v306, %v302
      %v343 = vpack.c.b16 %v311, %v307
      %v344 = vpack.c.b16 %v312, %v308
      %v345 = vpack.c.b16 %v313, %v309
      %v346 = vpack.c.b16 %v314, %v310
      %v347 = vpack.c.b16 %v319, %v315
      %v348 = vpack.c.b16 %v320, %v316
      %v349 = vpack.c.b16 %v321, %v317
      %v350 = vpack.c.b16 %v322, %v318
      %vm375 = vcmask 883712
      %v377 = vsel %vm375, %v235, 0
      %v380 = vsel %vm375, %v236, 0
      %v383 = vsel %vm375, %v237, 0
      %v386 = vsel %vm375, %v238, 0
      %vm388 = vcmask 1045504
      %v390 = vsel %vm388, %v347, 0
      %v393 = vsel %vm388, %v348, 0
      %v396 = vsel %vm388, %v349, 0
      %v399 = vsel %vm388, %v350, 0
      %401 = vmatprep.subr.bf16.mxu0 %v324
      %402 = vmatpush1.bf16.msra.mxu0 %v323
      %403 = vmatprep.subr.bf16.mxu0 %v328
      %404 = vmatpush1.bf16.msra.mxu0 %v327
      %405 = vmatprep.subr.bf16.mxu0 %v332
      %406 = vmatpush1.bf16.msra.mxu0 %v331
      %407 = vmatprep.subr.bf16.mxu0 %v336
      %408 = vmatpush1.bf16.msra.mxu0 %v335
      %409 = vmatprep.subr.bf16.mxu0 %v340
      %410 = vmatpush1.bf16.msra.mxu0 %v339
      %411 = vmatprep.subr.bf16.mxu0 %v344
      %412 = vmatpush1.bf16.msra.mxu0 %v343
      %413 = vmatprep.subr.bf16.mxu0 %v393
      %414 = vmatpush1.bf16.msra.mxu0 %v390
      %415 = vmatprep.subr.bf16.mxu0 0
      %416 = vmatpush1.bf16.msra.mxu0 0
      %417 = vmatprep.subr.bf16.mxu0 0
      %418 = vmatpush1.bf16.msra.mxu0 0
      %419 = vmatprep.subr.bf16.mxu0 0
      %420 = vmatpush1.bf16.msra.mxu0 0
      %421 = vmatprep.subr.bf16.mxu0 0
      %422 = vmatpush1.bf16.msra.mxu0 0
      %423 = vmatprep.subr.bf16.mxu0 0
      %424 = vmatpush1.bf16.msra.mxu0 0
      %425 = vmatprep.subr.bf16.mxu0 0
      %426 = vmatpush1.bf16.msra.mxu0 0
      %427 = vmatprep.subr.bf16.mxu0 0
      %428 = vmatpush1.bf16.msra.mxu0 0
      %429 = vmatprep.subr.bf16.mxu0 0
      %430 = vmatpush1.bf16.msra.mxu0 0
      %431 = vmatprep.subr.bf16.mxu0 0
      %432 = vmatpush1.bf16.msra.mxu0 0
      %433 = vmatprep.mubr.bf16.mxu0 0
      %434 = vmatmul.mubr.bf16.gmra.mrb[0].mxu0 %v377
      %v435 = vpop.f32.mrb[0].mxu0
      %v436 = vadd.f32 0.0, %v435
      %v437 = vpop.f32.mrb[0].mxu0
      %v438 = vadd.f32 0.0, %v437
      %v439 = vpop.f32.mrb[0].mxu0
      %v440 = vadd.f32 0.0, %v439
      %v441 = vpop.f32.mrb[0].mxu0
      %v442 = vadd.f32 0.0, %v441
      %443 = vmatprep.mubr.bf16.mxu0 0
      %444 = vmatmul.mubr.bf16.gmra.mrb[0].mxu0 %v380
      %v445 = vpop.f32.mrb[0].mxu0
      %v446 = vadd.f32 0.0, %v445
      %v447 = vpop.f32.mrb[0].mxu0
      %v448 = vadd.f32 0.0, %v447
      %v449 = vpop.f32.mrb[0].mxu0
      %v450 = vadd.f32 0.0, %v449
      %v451 = vpop.f32.mrb[0].mxu0
      %v452 = vadd.f32 0.0, %v451
      %453 = vmatprep.mubr.bf16.mxu0 0
      %454 = vmatmul.mubr.bf16.gmra.mrb[0].mxu0 %v383
      %v455 = vpop.f32.mrb[0].mxu0
      %v456 = vadd.f32 0.0, %v455
      %v457 = vpop.f32.mrb[0].mxu0
      %v458 = vadd.f32 0.0, %v457
      %v459 = vpop.f32.mrb[0].mxu0
      %v460 = vadd.f32 0.0, %v459
      %v461 = vpop.f32.mrb[0].mxu0
      %v462 = vadd.f32 0.0, %v461
      %463 = vmatprep.mubr.bf16.mxu0 0
      %464 = vmatmul.mubr.bf16.gmra.mrb[0].mxu0 %v386
      %v465 = vpop.f32.mrb[0].mxu0
      %v466 = vadd.f32 0.0, %v465
      %v467 = vpop.f32.mrb[0].mxu0
      %v468 = vadd.f32 0.0, %v467
      %v469 = vpop.f32.mrb[0].mxu0
      %v470 = vadd.f32 0.0, %v469
      %v471 = vpop.f32.mrb[0].mxu0
      %v472 = vadd.f32 0.0, %v471
      %473 = vdwg.mxu0
      %474 = vmatprep.subr.bf16.mxu0 %v326
      %475 = vmatpush1.bf16.msra.mxu0 %v325
      %476 = vmatprep.subr.bf16.mxu0 %v330
      %477 = vmatpush1.bf16.msra.mxu0 %v329
      %478 = vmatprep.subr.bf16.mxu0 %v334
      %479 = vmatpush1.bf16.msra.mxu0 %v333
      %480 = vmatprep.subr.bf16.mxu0 %v338
      %481 = vmatpush1.bf16.msra.mxu0 %v337
      %482 = vmatprep.subr.bf16.mxu0 %v342
      %483 = vmatpush1.bf16.msra.mxu0 %v341
      %484 = vmatprep.subr.bf16.mxu0 %v346
      %485 = vmatpush1.bf16.msra.mxu0 %v345
      %486 = vmatprep.subr.bf16.mxu0 %v399
      %487 = vmatpush1.bf16.msra.mxu0 %v396
      %488 = vmatprep.subr.bf16.mxu0 0
      %489 = vmatpush1.bf16.msra.mxu0 0
      %490 = vmatprep.subr.bf16.mxu0 0
      %491 = vmatpush1.bf16.msra.mxu0 0
      %492 = vmatprep.subr.bf16.mxu0 0
      %493 = vmatpush1.bf16.msra.mxu0 0
      %494 = vmatprep.subr.bf16.mxu0 0
      %495 = vmatpush1.bf16.msra.mxu0 0
      %496 = vmatprep.subr.bf16.mxu0 0
      %497 = vmatpush1.bf16.msra.mxu0 0
      %498 = vmatprep.subr.bf16.mxu0 0
      %499 = vmatpush1.bf16.msra.mxu0 0
      %500 = vmatprep.subr.bf16.mxu0 0
      %501 = vmatpush1.bf16.msra.mxu0 0
      %502 = vmatprep.subr.bf16.mxu0 0
      %503 = vmatpush1.bf16.msra.mxu0 0
      %504 = vmatprep.subr.bf16.mxu0 0
      %505 = vmatpush1.bf16.msra.mxu0 0
      %506 = vmatprep.mubr.bf16.mxu0 0
      %507 = vmatmul.mubr.bf16.gmra.mrb[0].mxu0 %v377
      %v508 = vpop.f32.mrb[0].mxu0
      %v509 = vadd.f32 0.0, %v508
      %v510 = vpop.f32.mrb[0].mxu0
      %v511 = vadd.f32 0.0, %v510
      %v512 = vpop.f32.mrb[0].mxu0
      %v513 = vadd.f32 0.0, %v512
      %v514 = vpop.f32.mrb[0].mxu0
      %v515 = vadd.f32 0.0, %v514
      %516 = vmatprep.mubr.bf16.mxu0 0
      %517 = vmatmul.mubr.bf16.gmra.mrb[0].mxu0 %v380
      %v518 = vpop.f32.mrb[0].mxu0
      %v519 = vadd.f32 0.0, %v518
      %v520 = vpop.f32.mrb[0].mxu0
      %v521 = vadd.f32 0.0, %v520
      %v522 = vpop.f32.mrb[0].mxu0
      %v523 = vadd.f32 0.0, %v522
      %v524 = vpop.f32.mrb[0].mxu0
      %v525 = vadd.f32 0.0, %v524
      %526 = vmatprep.mubr.bf16.mxu0 0
      %527 = vmatmul.mubr.bf16.gmra.mrb[0].mxu0 %v383
      %v528 = vpop.f32.mrb[0].mxu0
      %v529 = vadd.f32 0.0, %v528
      %v530 = vpop.f32.mrb[0].mxu0
      %v531 = vadd.f32 0.0, %v530
      %v532 = vpop.f32.mrb[0].mxu0
      %v533 = vadd.f32 0.0, %v532
      %v534 = vpop.f32.mrb[0].mxu0
      %v535 = vadd.f32 0.0, %v534
      %536 = vmatprep.mubr.bf16.mxu0 0
      %537 = vmatmul.mubr.bf16.gmra.mrb[0].mxu0 %v386
      %v538 = vpop.f32.mrb[0].mxu0
      %v539 = vadd.f32 0.0, %v538
      %v540 = vpop.f32.mrb[0].mxu0
      %v541 = vadd.f32 0.0, %v540
      %v542 = vpop.f32.mrb[0].mxu0
      %v543 = vadd.f32 0.0, %v542
      %v544 = vpop.f32.mrb[0].mxu0
      %v545 = vadd.f32 0.0, %v544
      %546 = vdwg.mxu0
      %v547 = vadd.f32 %v436, %v438
      %v548 = vadd.f32 %v547, %v509
      %v549 = vadd.f32 %v548, %v511
      %550 = vadd.xlane.f32.xlu0 %v549
      %v551 = vpop.xlane.xlu0 %550
      %v552 = vadd.f32 %v440, %v442
      %v553 = vadd.f32 %v552, %v513
      %v554 = vadd.f32 %v553, %v515
      %555 = vadd.xlane.f32.xlu0 %v554
      %v556 = vpop.xlane.xlu0 %555
      %v557 = vadd.f32 %v446, %v448
      %v558 = vadd.f32 %v557, %v519
      %v559 = vadd.f32 %v558, %v521
      %560 = vadd.xlane.f32.xlu0 %v559
      %v561 = vpop.xlane.xlu0 %560
      %v562 = vadd.f32 %v450, %v452
      %v563 = vadd.f32 %v562, %v523
      %v564 = vadd.f32 %v563, %v525
      %565 = vadd.xlane.f32.xlu0 %v564
      %v566 = vpop.xlane.xlu0 %565
      %v567 = vadd.f32 %v456, %v458
      %v568 = vadd.f32 %v567, %v529
      %v569 = vadd.f32 %v568, %v531
      %570 = vadd.xlane.f32.xlu0 %v569
      %v571 = vpop.xlane.xlu0 %570
      %v572 = vadd.f32 %v460, %v462
      %v573 = vadd.f32 %v572, %v533
      %v574 = vadd.f32 %v573, %v535
      %575 = vadd.xlane.f32.xlu0 %v574
      %v576 = vpop.xlane.xlu0 %575
      %v577 = vadd.f32 %v466, %v468
      %v578 = vadd.f32 %v577, %v539
      %v579 = vadd.f32 %v578, %v541
      %580 = vadd.xlane.f32.xlu0 %v579
      %v581 = vpop.xlane.xlu0 %580
      %v582 = vadd.f32 %v470, %v472
      %v583 = vadd.f32 %v582, %v543
      %v584 = vadd.f32 %v583, %v545
      %585 = vadd.xlane.f32.xlu0 %v584
      %v586 = vpop.xlane.xlu0 %585
      %v587 = vmul.f32 %v436, %v436
      %v588 = vmul.f32 %v438, %v438
      %v589 = vmul.f32 %v509, %v509
      %v590 = vmul.f32 %v511, %v511
      %v591 = vmul.f32 %v440, %v440
      %v592 = vmul.f32 %v442, %v442
      %v593 = vmul.f32 %v513, %v513
      %v594 = vmul.f32 %v515, %v515
      %v595 = vmul.f32 %v446, %v446
      %v596 = vmul.f32 %v448, %v448
      %v597 = vmul.f32 %v519, %v519
      %v598 = vmul.f32 %v521, %v521
      %v599 = vmul.f32 %v450, %v450
      %v600 = vmul.f32 %v452, %v452
      %v601 = vmul.f32 %v523, %v523
      %v602 = vmul.f32 %v525, %v525
      %v603 = vmul.f32 %v456, %v456
      %v604 = vmul.f32 %v458, %v458
      %v605 = vmul.f32 %v529, %v529
      %v606 = vmul.f32 %v531, %v531
      %v607 = vmul.f32 %v460, %v460
      %v608 = vmul.f32 %v462, %v462
      %v609 = vmul.f32 %v533, %v533
      %v610 = vmul.f32 %v535, %v535
      %v611 = vmul.f32 %v466, %v466
      %v612 = vmul.f32 %v468, %v468
      %v613 = vmul.f32 %v539, %v539
      %v614 = vmul.f32 %v541, %v541
      %v615 = vmul.f32 %v470, %v470
      %v616 = vmul.f32 %v472, %v472
      %v617 = vmul.f32 %v543, %v543
      %v618 = vmul.f32 %v545, %v545
      %v619 = vadd.f32 %v587, %v588
      %v620 = vadd.f32 %v619, %v589
      %v621 = vadd.f32 %v620, %v590
      %622 = vadd.xlane.f32.xlu0 %v621
      %v623 = vpop.xlane.xlu0 %622
      %v624 = vadd.f32 %v591, %v592
      %v625 = vadd.f32 %v624, %v593
      %v626 = vadd.f32 %v625, %v594
      %627 = vadd.xlane.f32.xlu0 %v626
      %v628 = vpop.xlane.xlu0 %627
      %v629 = vadd.f32 %v595, %v596
      %v630 = vadd.f32 %v629, %v597
      %v631 = vadd.f32 %v630, %v598
      %632 = vadd.xlane.f32.xlu0 %v631
      %v633 = vpop.xlane.xlu0 %632
      %v634 = vadd.f32 %v599, %v600
      %v635 = vadd.f32 %v634, %v601
      %v636 = vadd.f32 %v635, %v602
      %637 = vadd.xlane.f32.xlu0 %v636
      %v638 = vpop.xlane.xlu0 %637
      %v639 = vadd.f32 %v603, %v604
      %v640 = vadd.f32 %v639, %v605
      %v641 = vadd.f32 %v640, %v606
      %642 = vadd.xlane.f32.xlu0 %v641
      %v643 = vpop.xlane.xlu0 %642
      %v644 = vadd.f32 %v607, %v608
      %v645 = vadd.f32 %v644, %v609
      %v646 = vadd.f32 %v645, %v610
      %647 = vadd.xlane.f32.xlu0 %v646
      %v648 = vpop.xlane.xlu0 %647
      %v649 = vadd.f32 %v611, %v612
      %v650 = vadd.f32 %v649, %v613
      %v651 = vadd.f32 %v650, %v614
      %652 = vadd.xlane.f32.xlu0 %v651
      %v653 = vpop.xlane.xlu0 %652
      %v654 = vadd.f32 %v615, %v616
      %v655 = vadd.f32 %v654, %v617
      %v656 = vadd.f32 %v655, %v618
      %657 = vadd.xlane.f32.xlu0 %v656
      %v658 = vpop.xlane.xlu0 %657
      %vm659 = vcmask 7168
      %v660 = vsel %vm659, %v551, %v623
      %v661 = vsel %vm659, %v556, %v628
      %v662 = vsel %vm659, %v561, %v633
      %v663 = vsel %vm659, %v566, %v638
      %v664 = vsel %vm659, %v571, %v643
      %v665 = vsel %vm659, %v576, %v648
      %v666 = vsel %vm659, %v581, %v653
      %v667 = vsel %vm659, %v586, %v658
      %vm668 = vcmask 15360
      %669 = vst.msk [vmem:[%s181] sm:$0xff] %vm668, %v660
      %670 = vst.msk [vmem:[%s181 + $0x8] sm:$0xff] %vm668, %v661
      %671 = vst.msk [vmem:[%s181 + $0x10] sm:$0xff] %vm668, %v662
      %672 = vst.msk [vmem:[%s181 + $0x18] sm:$0xff] %vm668, %v663
      %673 = vst.msk [vmem:[%s181 + $0x20] sm:$0xff] %vm668, %v664
      %674 = vst.msk [vmem:[%s181 + $0x28] sm:$0xff] %vm668, %v665
      %675 = vst.msk [vmem:[%s181 + $0x30] sm:$0xff] %vm668, %v666
      %676 = vst.msk [vmem:[%s181 + $0x38] sm:$0xff] %vm668, %v667
      %p677 = scmp.lt.s32.totalorder %s17, 1
      %s678 = scalar_select %p677, %s17, 1
      %p679 = scmp.lt.s32.totalorder %s18, 0
      %s680 = scalar_select %p679, %s18, 0
      %s681 = smul.addr %s680, 8
      %s682 = smul.addr %s678, 8
      %s683 = sadd.s32 %s681, %s682
      %s684 = smul.addr %s683, 8
      %s685 = scalar_lea.vmem %s2, %s684
      // Predicated region
      $region29: #{tpu_custom_call.1} parent=27 // pred_check
        %p686 = pneg %p94
      $region30: #{tpu_custom_call.1} parent=27 // pred_check_branch
        %688 = sbr.rel (%p686) target = $region32
      $region31: #{tpu_custom_call.1} parent=27 // pred_region
        _
      $region32: #{tpu_custom_call.1} parent=27 // pred_fallthru
        _
    $region28: #{tpu_custom_call.1} parent=5 // pred_fallthru
      _
    %p689 = scmp.le.s32.totalorder 2, %s8
    // Predicated region
    $region33: #{tpu_custom_call.1} parent=5 // pred_check
      %p690 = pneg %p689
    $region34: #{tpu_custom_call.1} parent=5 // pred_check_branch
      %692 = sbr.rel (%p690) target = $region36
    $region35: #{tpu_custom_call.1} parent=5 // pred_region
      %s693 = ssub.s32 %s8, 2
      // Predicated region
      $region37: #{tpu_custom_call.1} parent=35 // pred_check
        %p694 = pneg %p100
      $region38: #{tpu_custom_call.1} parent=35 // pred_check_branch
        %696 = sbr.rel (%p694) target = $region40
      $region39: #{tpu_custom_call.1} parent=35 // pred_region
        %p697 = scmp.lt.s32.totalorder %s19, 1
        %s698 = scalar_select %p697, %s19, 1
        %p699 = scmp.lt.s32.totalorder %s20, 0
        %s700 = scalar_select %p699, %s20, 0
        %s701 = smul.addr %s700, 8
        %s702 = smul.addr %s698, 8
        %s703 = sadd.s32 %s701, %s702
        %s704 = smul.addr %s703, 8
        %s705 = scalar_lea.vmem %s2, %s704
      $region40: #{tpu_custom_call.1} parent=35 // pred_fallthru
        _
    $region36: #{tpu_custom_call.1} parent=5 // pred_fallthru
      _
  $region6: #{tpu_custom_call.1} parent=0 // loop_footer
    %s12 = sadd.s32 1, %s8
  $region7: #{tpu_custom_call.1} parent=0 // loop_footer_branch
    %7 = sbr.rel target = $region3
  $region8: #{tpu_custom_call.1} parent=0 // loop_exit
    _

</llo_original>
